<compile_context>
chip_gen: v7x
topology: tpu7x:2x2x1
jax: 0.10.0
libtpu: 0.0.40
codegen_flags: <defaults>
</compile_context>

<pallas_src>
import math

import jax
import jax.numpy as jnp
from jax.experimental import pallas as pl
from jax.experimental.pallas import tpu as pltpu

_LANES = 128
_SUBLANES = 8
_VREG = _LANES * _SUBLANES  # 1024 f32 elements per (8,128) vreg tile


def _make_lstm_or_kernel(seq, t_tile, nt, unroll):
    """Build the kernel with static config closed over (seq/t_tile/nt are trace-time constants)."""
    rem = seq - (nt - 1) * t_tile  # valid steps in the last time block (== t_tile if it divides)

    def kernel(w_ref, b_ref, x_ref, h_out_ref, h_sc, c_sc):
        # w_ref: SMEM (8,) = [wi_i, wi_f, wi_g, wi_o, wh_i, wh_f, wh_g, wh_o] (i/f/o pre-scaled 0.5)
        # b_ref: SMEM (4,) = bias_ih + bias_hh, gate order (i, f, g, o), i/f/o pre-scaled 0.5
        # x_ref: VMEM block (t_tile, 1, rows, 128)
        # h_out_ref: VMEM block (1, rows, 128)
        # h_sc, c_sc: VMEM scratch (rows, 128) -- carry across time blocks
        t_blk = pl.program_id(1)

        @pl.when(t_blk == 0)
        def _init():
            h_sc[...] = jnp.zeros_like(h_sc)
            c_sc[...] = jnp.zeros_like(c_sc)

        wi_i = w_ref[0]; wi_f = w_ref[1]; wi_g = w_ref[2]; wi_o = w_ref[3]
        wh_i = w_ref[4]; wh_f = w_ref[5]; wh_g = w_ref[6]; wh_o = w_ref[7]
        b_i = b_ref[0]; b_f = b_ref[1]; b_g = b_ref[2]; b_o = b_ref[3]

        def step(t, h, c, needs_mask):
            x_t = x_ref[t, 0]  # (rows, 128) slice straight from the pipelined VMEM block
            # sigmoid(z) = 0.5*tanh(0.5*z) + 0.5; the inner 0.5 is folded into w/b for i, f, o.
            i = 0.5 * jnp.tanh(wi_i * x_t + wh_i * h + b_i) + 0.5
            f = 0.5 * jnp.tanh(wi_f * x_t + wh_f * h + b_f) + 0.5
            g = jnp.tanh(wi_g * x_t + wh_g * h + b_g)
            o = 0.5 * jnp.tanh(wi_o * x_t + wh_o * h + b_o) + 0.5
            c_new = f * c + i * g
            h_new = o * jnp.tanh(c_new)
            if needs_mask:
                # Tail steps past seq must not advance the recurrence: gate BOTH h and c.
                valid = (t_blk * t_tile + t) < seq
                h_new = jnp.where(valid, h_new, h)
                c_new = jnp.where(valid, c_new, c)
            return h_new, c_new

        h = h_sc[...]
        c = c_sc[...]
        if t_tile <= 16:
            # Short tile: full static unroll; mask only the step offsets that can overhang seq.
            for t in range(t_tile):
                h, c = step(t, h, c, needs_mask=((nt - 1) * t_tile + t) >= seq)
        else:
            # Long tile: modest unroll keeps the EUP FIFO streaming without vreg spills.
            def body(t, carry):
                hh, cc = carry
                return step(t, hh, cc, needs_mask=(rem != t_tile))

            h, c = jax.lax.fori_loop(0, t_tile, body, (h, c), unroll=unroll)

        h_sc[...] = h
        c_sc[...] = c

        # Output block index is constant across the (innermost, "arbitrary") time axis, so the
        # out buffer stays resident; write it once on the final time block.
        @pl.when(t_blk == pl.num_programs(1) - 1)
        def _finalize():
            h_out_ref[0] = h

    return kernel


def recurrent_differentiable_or(proba_tensor, w_ih, w_hh, b_ih, b_hh):
    """proba_tensor: (seq, 1, batch). Returns h of shape (1, batch, 1) like PyTorch."""
    seq, in_dim, batch = proba_tensor.shape
    assert in_dim == 1, "LSTM input_size is 1"
    x = proba_tensor.reshape(seq, batch).astype(jnp.float32)  # contiguous view, no HBM pass

    # --- batch blocking: rows sublanes x 128 lanes per block, multiple vreg tiles interleaved ---
    n_vreg = max(1, math.ceil(batch / _VREG))
    if n_vreg >= 8:
        tiles_per_block = 4          # rows=32: deep EUP pipeline, nb >= 2 for v7x megacore
    elif n_vreg >= 4:
        tiles_per_block = 2          # rows=16: keep nb == 2 so v7x's second core has work
    else:
        tiles_per_block = n_vreg     # tiny batch: single block, no gratuitous padding
    rows = _SUBLANES * tiles_per_block
    block_b = rows * _LANES
    nb = max(1, math.ceil(batch / block_b))
    bp = nb * block_b

    if bp != batch:
        x = jnp.pad(x, ((0, 0), (0, bp - batch)))
    # Natural layout (seq, nb, rows, 128) -- no wrapper-side HBM transpose; the BlockSpec DMA
    # strides over the leading time axis in contiguous rows*128*4-byte chunks per step.
    x = x.reshape(seq, nb, rows, _LANES)

    # --- time tiling: large fixed tile, tail masked in-kernel (t_tile need not divide seq) ---
    t_tile = min(seq, 128)
    nt = max(1, math.ceil(seq / t_tile))

    # pack params: gate order (i, f, g, o).  Fold the 0.5 of sigmoid(z)=0.5*tanh(0.5z)+0.5 into
    # the i/f/o weights and biases so the hot loop only pays one tanh per gate.
    gate_scale = jnp.array([0.5, 0.5, 1.0, 0.5], jnp.float32)
    w_i = w_ih.reshape(4).astype(jnp.float32) * gate_scale
    w_h = w_hh.reshape(4).astype(jnp.float32) * gate_scale
    w = jnp.concatenate([w_i, w_h])                                # (8,)
    b = (b_ih + b_hh).astype(jnp.float32) * gate_scale             # (4,)

    kernel = _make_lstm_or_kernel(seq, t_tile, nt, unroll=8)

    h_packed = pl.pallas_call(
        kernel,
        out_shape=jax.ShapeDtypeStruct((nb, rows, _LANES), jnp.float32),
        grid_spec=pltpu.PrefetchScalarGridSpec(
            num_scalar_prefetch=0,
            grid=(nb, nt),
            in_specs=[
                pl.BlockSpec(memory_space=pltpu.MemorySpace.SMEM),                 # w (8,)
                pl.BlockSpec(memory_space=pltpu.MemorySpace.SMEM),                 # b (4,)
                pl.BlockSpec((t_tile, 1, rows, _LANES), lambda i, t: (t, i, 0, 0)),
            ],
            out_specs=pl.BlockSpec((1, rows, _LANES), lambda i, t: (i, 0, 0)),
            scratch_shapes=[
                pltpu.VMEM((rows, _LANES), jnp.float32),   # h carry
                pltpu.VMEM((rows, _LANES), jnp.float32),   # c carry
            ],
        ),
        compiler_params=pltpu.CompilerParams(
            dimension_semantics=("parallel", "arbitrary"),
        ),
        cost_estimate=pl.CostEstimate(
            flops=25 * seq * bp,
            transcendentals=5 * seq * bp,
            bytes_accessed=4 * seq * bp + 4 * bp,
        ),
    )(w, b, x)

    # drop batch padding (padded lanes hold garbage h), restore PyTorch h shape (1, B, 1)
    h = h_packed.reshape(bp)[:batch]
    return h.reshape(1, batch, 1)


def _reference_lstm(proba_tensor, w_ih, w_hh, b_ih, b_hh):
    """Pure-JAX reference of the same forward (for sanity check)."""
    seq, _, batch = proba_tensor.shape
    x = proba_tensor.reshape(seq, batch).astype(jnp.float32)
    w_ih = w_ih.reshape(4)
    w_hh = w_hh.reshape(4)
    b = b_ih + b_hh
    h = jnp.zeros((batch,), jnp.float32)
    c = jnp.zeros((batch,), jnp.float32)
    for t in range(seq):
        xt = x[t]
        i = jax.nn.sigmoid(w_ih[0] * xt + w_hh[0] * h + b[0])
        f = jax.nn.sigmoid(w_ih[1] * xt + w_hh[1] * h + b[1])
        g = jnp.tanh(w_ih[2] * xt + w_hh[2] * h + b[2])
        o = jax.nn.sigmoid(w_ih[3] * xt + w_hh[3] * h + b[3])
        c = f * c + i * g
        h = o * jnp.tanh(c)
    return h.reshape(1, batch, 1)


if __name__ == "__main__":
    key = jax.random.PRNGKey(0)
    k_x, k_wi, k_wh, k_bi, k_bh = jax.random.split(key, 5)

    seq, batch = 8, 8
    # input matching PyTorch forward's expected layout: (seq, input_size=1, batch)
    proba_tensor = jax.random.uniform(k_x, (seq, 1, batch), dtype=jnp.float32)

    # deterministic LSTM parameters; PyTorch default init is U(-1/sqrt(H), 1/sqrt(H)) = U(-1, 1)
    w_ih = jax.random.uniform(k_wi, (4, 1), minval=-1.0, maxval=1.0)
    w_hh = jax.random.uniform(k_wh, (4, 1), minval=-1.0, maxval=1.0)
    b_ih = jax.random.uniform(k_bi, (4,), minval=-1.0, maxval=1.0)
    b_hh = jax.random.uniform(k_bh, (4,), minval=-1.0, maxval=1.0)

    h_kernel = recurrent_differentiable_or(proba_tensor, w_ih, w_hh, b_ih, b_hh)
    h_kernel = jax.block_until_ready(h_kernel)

    h_ref = _reference_lstm(proba_tensor, w_ih, w_hh, b_ih, b_hh)
    assert h_kernel.shape == (1, batch, 1)
    assert jnp.allclose(h_kernel, h_ref, atol=1e-5, rtol=1e-5)

    print("KERNEL_OK")
</pallas_src>

<mosaic_0001>
module attributes {stable_mosaic.version = 11 : i64} {
  func.func @kernel(%arg0: i32, %arg1: i32, %arg2: memref<8xf32, #tpu.memory_space<smem>>, %arg3: memref<4xf32, #tpu.memory_space<smem>>, %arg4: memref<8x1x8x128xf32, #tpu.memory_space<vmem>>, %arg5: memref<1x8x128xf32, #tpu.memory_space<vmem>>, %arg6: memref<8x128xf32, #tpu.memory_space<vmem>>, %arg7: memref<8x128xf32, #tpu.memory_space<vmem>>) attributes {dimension_semantics = [#tpu.dimension_semantics<parallel>, #tpu.dimension_semantics<arbitrary>], iteration_bounds = array<i64: 1, 1>, scalar_prefetch = 0 : i64, scratch_operands = 2 : i64, tpu.core_type = #tpu.core_type<tc>, window_params = [{transform_indices = @transform_0, window_bounds = array<i64: 8>}, {transform_indices = @transform_1, window_bounds = array<i64: 4>}, {transform_indices = @transform_2, window_bounds = array<i64: 8, 1, 8, 128>}, {transform_indices = @transform_3, window_bounds = array<i64: 1, 8, 128>}]} {
    %c0_i32 = arith.constant 0 : i32
    %0 = arith.cmpi eq, %arg1, %c0_i32 : i32
    %1 = arith.extui %0 : i1 to i32
    %c0_i32_0 = arith.constant 0 : i32
    %2 = arith.cmpi ne, %1, %c0_i32_0 : i32
    scf.if %2 {
      %cst_94 = arith.constant 0.000000e+00 : f32
      %430 = vector.broadcast %cst_94 : f32 to vector<8x128xf32>
      %c0_95 = arith.constant 0 : index
      %c0_96 = arith.constant 0 : index
      %431 = vector.load %arg6[%c0_95, %c0_96] : memref<8x128xf32, #tpu.memory_space<vmem>>, vector<8x128xf32>
      tpu.vector_store %arg6[%c0_95, %c0_96], %430 {strides = array<i32>} : memref<8x128xf32, #tpu.memory_space<vmem>>, vector<8x128xf32>,
      %cst_97 = arith.constant 0.000000e+00 : f32
      %432 = vector.broadcast %cst_97 : f32 to vector<8x128xf32>
      %c0_98 = arith.constant 0 : index
      %c0_99 = arith.constant 0 : index
      %433 = vector.load %arg7[%c0_98, %c0_99] : memref<8x128xf32, #tpu.memory_space<vmem>>, vector<8x128xf32>
      tpu.vector_store %arg7[%c0_98, %c0_99], %432 {strides = array<i32>} : memref<8x128xf32, #tpu.memory_space<vmem>>, vector<8x128xf32>,
    } else {
    }
    %c0 = arith.constant 0 : index
    %3 = memref.load %arg2[%c0] : memref<8xf32, #tpu.memory_space<smem>>
    %c1 = arith.constant 1 : index
    %4 = memref.load %arg2[%c1] : memref<8xf32, #tpu.memory_space<smem>>
    %c2 = arith.constant 2 : index
    %5 = memref.load %arg2[%c2] : memref<8xf32, #tpu.memory_space<smem>>
    %c3 = arith.constant 3 : index
    %6 = memref.load %arg2[%c3] : memref<8xf32, #tpu.memory_space<smem>>
    %c4 = arith.constant 4 : index
    %7 = memref.load %arg2[%c4] : memref<8xf32, #tpu.memory_space<smem>>
    %c5 = arith.constant 5 : index
    %8 = memref.load %arg2[%c5] : memref<8xf32, #tpu.memory_space<smem>>
    %c6 = arith.constant 6 : index
    %9 = memref.load %arg2[%c6] : memref<8xf32, #tpu.memory_space<smem>>
    %c7 = arith.constant 7 : index
    %10 = memref.load %arg2[%c7] : memref<8xf32, #tpu.memory_space<smem>>
    %c0_1 = arith.constant 0 : index
    %11 = memref.load %arg3[%c0_1] : memref<4xf32, #tpu.memory_space<smem>>
    %c1_2 = arith.constant 1 : index
    %12 = memref.load %arg3[%c1_2] : memref<4xf32, #tpu.memory_space<smem>>
    %c2_3 = arith.constant 2 : index
    %13 = memref.load %arg3[%c2_3] : memref<4xf32, #tpu.memory_space<smem>>
    %c3_4 = arith.constant 3 : index
    %14 = memref.load %arg3[%c3_4] : memref<4xf32, #tpu.memory_space<smem>>
    %c0_5 = arith.constant 0 : index
    %c0_6 = arith.constant 0 : index
    %15 = vector.load %arg6[%c0_5, %c0_6] : memref<8x128xf32, #tpu.memory_space<vmem>>, vector<8x128xf32>
    %c0_7 = arith.constant 0 : index
    %c0_8 = arith.constant 0 : index
    %16 = vector.load %arg7[%c0_7, %c0_8] : memref<8x128xf32, #tpu.memory_space<vmem>>, vector<8x128xf32>
    %c0_9 = arith.constant 0 : index
    %c0_10 = arith.constant 0 : index
    %c0_11 = arith.constant 0 : index
    %c0_12 = arith.constant 0 : index
    %17 = vector.load %arg4[%c0_9, %c0_10, %c0_11, %c0_12] : memref<8x1x8x128xf32, #tpu.memory_space<vmem>>, vector<1x1x8x128xf32>
    %18 = vector.shape_cast %17 : vector<1x1x8x128xf32> to vector<8x128xf32>
    %19 = vector.broadcast %3 : f32 to vector<8x128xf32>
    %20 = arith.mulf %19, %18 : vector<8x128xf32>
    %21 = vector.broadcast %7 : f32 to vector<8x128xf32>
    %22 = arith.mulf %21, %15 : vector<8x128xf32>
    %23 = arith.addf %20, %22 : vector<8x128xf32>
    %24 = vector.broadcast %11 : f32 to vector<8x128xf32>
    %25 = arith.addf %23, %24 : vector<8x128xf32>
    %26 = math.tanh %25 : vector<8x128xf32>
    %cst = arith.constant 5.000000e-01 : f32
    %27 = vector.broadcast %cst : f32 to vector<8x128xf32>
    %28 = arith.mulf %27, %26 : vector<8x128xf32>
    %cst_13 = arith.constant 5.000000e-01 : f32
    %29 = vector.broadcast %cst_13 : f32 to vector<8x128xf32>
    %30 = arith.addf %28, %29 : vector<8x128xf32>
    %31 = vector.broadcast %4 : f32 to vector<8x128xf32>
    %32 = arith.mulf %31, %18 : vector<8x128xf32>
    %33 = vector.broadcast %8 : f32 to vector<8x128xf32>
    %34 = arith.mulf %33, %15 : vector<8x128xf32>
    %35 = arith.addf %32, %34 : vector<8x128xf32>
    %36 = vector.broadcast %12 : f32 to vector<8x128xf32>
    %37 = arith.addf %35, %36 : vector<8x128xf32>
    %38 = math.tanh %37 : vector<8x128xf32>
    %cst_14 = arith.constant 5.000000e-01 : f32
    %39 = vector.broadcast %cst_14 : f32 to vector<8x128xf32>
    %40 = arith.mulf %39, %38 : vector<8x128xf32>
    %cst_15 = arith.constant 5.000000e-01 : f32
    %41 = vector.broadcast %cst_15 : f32 to vector<8x128xf32>
    %42 = arith.addf %40, %41 : vector<8x128xf32>
    %43 = vector.broadcast %5 : f32 to vector<8x128xf32>
    %44 = arith.mulf %43, %18 : vector<8x128xf32>
    %45 = vector.broadcast %9 : f32 to vector<8x128xf32>
    %46 = arith.mulf %45, %15 : vector<8x128xf32>
    %47 = arith.addf %44, %46 : vector<8x128xf32>
    %48 = vector.broadcast %13 : f32 to vector<8x128xf32>
    %49 = arith.addf %47, %48 : vector<8x128xf32>
    %50 = math.tanh %49 : vector<8x128xf32>
    %51 = vector.broadcast %6 : f32 to vector<8x128xf32>
    %52 = arith.mulf %51, %18 : vector<8x128xf32>
    %53 = vector.broadcast %10 : f32 to vector<8x128xf32>
    %54 = arith.mulf %53, %15 : vector<8x128xf32>
    %55 = arith.addf %52, %54 : vector<8x128xf32>
    %56 = vector.broadcast %14 : f32 to vector<8x128xf32>
    %57 = arith.addf %55, %56 : vector<8x128xf32>
    %58 = math.tanh %57 : vector<8x128xf32>
    %cst_16 = arith.constant 5.000000e-01 : f32
    %59 = vector.broadcast %cst_16 : f32 to vector<8x128xf32>
    %60 = arith.mulf %59, %58 : vector<8x128xf32>
    %cst_17 = arith.constant 5.000000e-01 : f32
    %61 = vector.broadcast %cst_17 : f32 to vector<8x128xf32>
    %62 = arith.addf %60, %61 : vector<8x128xf32>
    %63 = arith.mulf %42, %16 : vector<8x128xf32>
    %64 = arith.mulf %30, %50 : vector<8x128xf32>
    %65 = arith.addf %63, %64 : vector<8x128xf32>
    %66 = math.tanh %65 : vector<8x128xf32>
    %67 = arith.mulf %62, %66 : vector<8x128xf32>
    %c1_18 = arith.constant 1 : index
    %c0_19 = arith.constant 0 : index
    %c0_20 = arith.constant 0 : index
    %c0_21 = arith.constant 0 : index
    %68 = vector.load %arg4[%c1_18, %c0_19, %c0_20, %c0_21] : memref<8x1x8x128xf32, #tpu.memory_space<vmem>>, vector<1x1x8x128xf32>
    %69 = vector.shape_cast %68 : vector<1x1x8x128xf32> to vector<8x128xf32>
    %70 = vector.broadcast %3 : f32 to vector<8x128xf32>
    %71 = arith.mulf %70, %69 : vector<8x128xf32>
    %72 = vector.broadcast %7 : f32 to vector<8x128xf32>
    %73 = arith.mulf %72, %67 : vector<8x128xf32>
    %74 = arith.addf %71, %73 : vector<8x128xf32>
    %75 = vector.broadcast %11 : f32 to vector<8x128xf32>
    %76 = arith.addf %74, %75 : vector<8x128xf32>
    %77 = math.tanh %76 : vector<8x128xf32>
    %cst_22 = arith.constant 5.000000e-01 : f32
    %78 = vector.broadcast %cst_22 : f32 to vector<8x128xf32>
    %79 = arith.mulf %78, %77 : vector<8x128xf32>
    %cst_23 = arith.constant 5.000000e-01 : f32
    %80 = vector.broadcast %cst_23 : f32 to vector<8x128xf32>
    %81 = arith.addf %79, %80 : vector<8x128xf32>
    %82 = vector.broadcast %4 : f32 to vector<8x128xf32>
    %83 = arith.mulf %82, %69 : vector<8x128xf32>
    %84 = vector.broadcast %8 : f32 to vector<8x128xf32>
    %85 = arith.mulf %84, %67 : vector<8x128xf32>
    %86 = arith.addf %83, %85 : vector<8x128xf32>
    %87 = vector.broadcast %12 : f32 to vector<8x128xf32>
    %88 = arith.addf %86, %87 : vector<8x128xf32>
    %89 = math.tanh %88 : vector<8x128xf32>
    %cst_24 = arith.constant 5.000000e-01 : f32
    %90 = vector.broadcast %cst_24 : f32 to vector<8x128xf32>
    %91 = arith.mulf %90, %89 : vector<8x128xf32>
    %cst_25 = arith.constant 5.000000e-01 : f32
    %92 = vector.broadcast %cst_25 : f32 to vector<8x128xf32>
    %93 = arith.addf %91, %92 : vector<8x128xf32>
    %94 = vector.broadcast %5 : f32 to vector<8x128xf32>
    %95 = arith.mulf %94, %69 : vector<8x128xf32>
    %96 = vector.broadcast %9 : f32 to vector<8x128xf32>
    %97 = arith.mulf %96, %67 : vector<8x128xf32>
    %98 = arith.addf %95, %97 : vector<8x128xf32>
    %99 = vector.broadcast %13 : f32 to vector<8x128xf32>
    %100 = arith.addf %98, %99 : vector<8x128xf32>
    %101 = math.tanh %100 : vector<8x128xf32>
    %102 = vector.broadcast %6 : f32 to vector<8x128xf32>
    %103 = arith.mulf %102, %69 : vector<8x128xf32>
    %104 = vector.broadcast %10 : f32 to vector<8x128xf32>
    %105 = arith.mulf %104, %67 : vector<8x128xf32>
    %106 = arith.addf %103, %105 : vector<8x128xf32>
    %107 = vector.broadcast %14 : f32 to vector<8x128xf32>
    %108 = arith.addf %106, %107 : vector<8x128xf32>
    %109 = math.tanh %108 : vector<8x128xf32>
    %cst_26 = arith.constant 5.000000e-01 : f32
    %110 = vector.broadcast %cst_26 : f32 to vector<8x128xf32>
    %111 = arith.mulf %110, %109 : vector<8x128xf32>
    %cst_27 = arith.constant 5.000000e-01 : f32
    %112 = vector.broadcast %cst_27 : f32 to vector<8x128xf32>
    %113 = arith.addf %111, %112 : vector<8x128xf32>
    %114 = arith.mulf %93, %65 : vector<8x128xf32>
    %115 = arith.mulf %81, %101 : vector<8x128xf32>
    %116 = arith.addf %114, %115 : vector<8x128xf32>
    %117 = math.tanh %116 : vector<8x128xf32>
    %118 = arith.mulf %113, %117 : vector<8x128xf32>
    %c2_28 = arith.constant 2 : index
    %c0_29 = arith.constant 0 : index
    %c0_30 = arith.constant 0 : index
    %c0_31 = arith.constant 0 : index
    %119 = vector.load %arg4[%c2_28, %c0_29, %c0_30, %c0_31] : memref<8x1x8x128xf32, #tpu.memory_space<vmem>>, vector<1x1x8x128xf32>
    %120 = vector.shape_cast %119 : vector<1x1x8x128xf32> to vector<8x128xf32>
    %121 = vector.broadcast %3 : f32 to vector<8x128xf32>
    %122 = arith.mulf %121, %120 : vector<8x128xf32>
    %123 = vector.broadcast %7 : f32 to vector<8x128xf32>
    %124 = arith.mulf %123, %118 : vector<8x128xf32>
    %125 = arith.addf %122, %124 : vector<8x128xf32>
    %126 = vector.broadcast %11 : f32 to vector<8x128xf32>
    %127 = arith.addf %125, %126 : vector<8x128xf32>
    %128 = math.tanh %127 : vector<8x128xf32>
    %cst_32 = arith.constant 5.000000e-01 : f32
    %129 = vector.broadcast %cst_32 : f32 to vector<8x128xf32>
    %130 = arith.mulf %129, %128 : vector<8x128xf32>
    %cst_33 = arith.constant 5.000000e-01 : f32
    %131 = vector.broadcast %cst_33 : f32 to vector<8x128xf32>
    %132 = arith.addf %130, %131 : vector<8x128xf32>
    %133 = vector.broadcast %4 : f32 to vector<8x128xf32>
    %134 = arith.mulf %133, %120 : vector<8x128xf32>
    %135 = vector.broadcast %8 : f32 to vector<8x128xf32>
    %136 = arith.mulf %135, %118 : vector<8x128xf32>
    %137 = arith.addf %134, %136 : vector<8x128xf32>
    %138 = vector.broadcast %12 : f32 to vector<8x128xf32>
    %139 = arith.addf %137, %138 : vector<8x128xf32>
    %140 = math.tanh %139 : vector<8x128xf32>
    %cst_34 = arith.constant 5.000000e-01 : f32
    %141 = vector.broadcast %cst_34 : f32 to vector<8x128xf32>
    %142 = arith.mulf %141, %140 : vector<8x128xf32>
    %cst_35 = arith.constant 5.000000e-01 : f32
    %143 = vector.broadcast %cst_35 : f32 to vector<8x128xf32>
    %144 = arith.addf %142, %143 : vector<8x128xf32>
    %145 = vector.broadcast %5 : f32 to vector<8x128xf32>
    %146 = arith.mulf %145, %120 : vector<8x128xf32>
    %147 = vector.broadcast %9 : f32 to vector<8x128xf32>
    %148 = arith.mulf %147, %118 : vector<8x128xf32>
    %149 = arith.addf %146, %148 : vector<8x128xf32>
    %150 = vector.broadcast %13 : f32 to vector<8x128xf32>
    %151 = arith.addf %149, %150 : vector<8x128xf32>
    %152 = math.tanh %151 : vector<8x128xf32>
    %153 = vector.broadcast %6 : f32 to vector<8x128xf32>
    %154 = arith.mulf %153, %120 : vector<8x128xf32>
    %155 = vector.broadcast %10 : f32 to vector<8x128xf32>
    %156 = arith.mulf %155, %118 : vector<8x128xf32>
    %157 = arith.addf %154, %156 : vector<8x128xf32>
    %158 = vector.broadcast %14 : f32 to vector<8x128xf32>
    %159 = arith.addf %157, %158 : vector<8x128xf32>
    %160 = math.tanh %159 : vector<8x128xf32>
    %cst_36 = arith.constant 5.000000e-01 : f32
    %161 = vector.broadcast %cst_36 : f32 to vector<8x128xf32>
    %162 = arith.mulf %161, %160 : vector<8x128xf32>
    %cst_37 = arith.constant 5.000000e-01 : f32
    %163 = vector.broadcast %cst_37 : f32 to vector<8x128xf32>
    %164 = arith.addf %162, %163 : vector<8x128xf32>
    %165 = arith.mulf %144, %116 : vector<8x128xf32>
    %166 = arith.mulf %132, %152 : vector<8x128xf32>
    %167 = arith.addf %165, %166 : vector<8x128xf32>
    %168 = math.tanh %167 : vector<8x128xf32>
    %169 = arith.mulf %164, %168 : vector<8x128xf32>
    %c3_38 = arith.constant 3 : index
    %c0_39 = arith.constant 0 : index
    %c0_40 = arith.constant 0 : index
    %c0_41 = arith.constant 0 : index
    %170 = vector.load %arg4[%c3_38, %c0_39, %c0_40, %c0_41] : memref<8x1x8x128xf32, #tpu.memory_space<vmem>>, vector<1x1x8x128xf32>
    %171 = vector.shape_cast %170 : vector<1x1x8x128xf32> to vector<8x128xf32>
    %172 = vector.broadcast %3 : f32 to vector<8x128xf32>
    %173 = arith.mulf %172, %171 : vector<8x128xf32>
    %174 = vector.broadcast %7 : f32 to vector<8x128xf32>
    %175 = arith.mulf %174, %169 : vector<8x128xf32>
    %176 = arith.addf %173, %175 : vector<8x128xf32>
    %177 = vector.broadcast %11 : f32 to vector<8x128xf32>
    %178 = arith.addf %176, %177 : vector<8x128xf32>
    %179 = math.tanh %178 : vector<8x128xf32>
    %cst_42 = arith.constant 5.000000e-01 : f32
    %180 = vector.broadcast %cst_42 : f32 to vector<8x128xf32>
    %181 = arith.mulf %180, %179 : vector<8x128xf32>
    %cst_43 = arith.constant 5.000000e-01 : f32
    %182 = vector.broadcast %cst_43 : f32 to vector<8x128xf32>
    %183 = arith.addf %181, %182 : vector<8x128xf32>
    %184 = vector.broadcast %4 : f32 to vector<8x128xf32>
    %185 = arith.mulf %184, %171 : vector<8x128xf32>
    %186 = vector.broadcast %8 : f32 to vector<8x128xf32>
    %187 = arith.mulf %186, %169 : vector<8x128xf32>
    %188 = arith.addf %185, %187 : vector<8x128xf32>
    %189 = vector.broadcast %12 : f32 to vector<8x128xf32>
    %190 = arith.addf %188, %189 : vector<8x128xf32>
    %191 = math.tanh %190 : vector<8x128xf32>
    %cst_44 = arith.constant 5.000000e-01 : f32
    %192 = vector.broadcast %cst_44 : f32 to vector<8x128xf32>
    %193 = arith.mulf %192, %191 : vector<8x128xf32>
    %cst_45 = arith.constant 5.000000e-01 : f32
    %194 = vector.broadcast %cst_45 : f32 to vector<8x128xf32>
    %195 = arith.addf %193, %194 : vector<8x128xf32>
    %196 = vector.broadcast %5 : f32 to vector<8x128xf32>
    %197 = arith.mulf %196, %171 : vector<8x128xf32>
    %198 = vector.broadcast %9 : f32 to vector<8x128xf32>
    %199 = arith.mulf %198, %169 : vector<8x128xf32>
    %200 = arith.addf %197, %199 : vector<8x128xf32>
    %201 = vector.broadcast %13 : f32 to vector<8x128xf32>
    %202 = arith.addf %200, %201 : vector<8x128xf32>
    %203 = math.tanh %202 : vector<8x128xf32>
    %204 = vector.broadcast %6 : f32 to vector<8x128xf32>
    %205 = arith.mulf %204, %171 : vector<8x128xf32>
    %206 = vector.broadcast %10 : f32 to vector<8x128xf32>
    %207 = arith.mulf %206, %169 : vector<8x128xf32>
    %208 = arith.addf %205, %207 : vector<8x128xf32>
    %209 = vector.broadcast %14 : f32 to vector<8x128xf32>
    %210 = arith.addf %208, %209 : vector<8x128xf32>
    %211 = math.tanh %210 : vector<8x128xf32>
    %cst_46 = arith.constant 5.000000e-01 : f32
    %212 = vector.broadcast %cst_46 : f32 to vector<8x128xf32>
    %213 = arith.mulf %212, %211 : vector<8x128xf32>
    %cst_47 = arith.constant 5.000000e-01 : f32
    %214 = vector.broadcast %cst_47 : f32 to vector<8x128xf32>
    %215 = arith.addf %213, %214 : vector<8x128xf32>
    %216 = arith.mulf %195, %167 : vector<8x128xf32>
    %217 = arith.mulf %183, %203 : vector<8x128xf32>
    %218 = arith.addf %216, %217 : vector<8x128xf32>
    %219 = math.tanh %218 : vector<8x128xf32>
    %220 = arith.mulf %215, %219 : vector<8x128xf32>
    %c4_48 = arith.constant 4 : index
    %c0_49 = arith.constant 0 : index
    %c0_50 = arith.constant 0 : index
    %c0_51 = arith.constant 0 : index
    %221 = vector.load %arg4[%c4_48, %c0_49, %c0_50, %c0_51] : memref<8x1x8x128xf32, #tpu.memory_space<vmem>>, vector<1x1x8x128xf32>
    %222 = vector.shape_cast %221 : vector<1x1x8x128xf32> to vector<8x128xf32>
    %223 = vector.broadcast %3 : f32 to vector<8x128xf32>
    %224 = arith.mulf %223, %222 : vector<8x128xf32>
    %225 = vector.broadcast %7 : f32 to vector<8x128xf32>
    %226 = arith.mulf %225, %220 : vector<8x128xf32>
    %227 = arith.addf %224, %226 : vector<8x128xf32>
    %228 = vector.broadcast %11 : f32 to vector<8x128xf32>
    %229 = arith.addf %227, %228 : vector<8x128xf32>
    %230 = math.tanh %229 : vector<8x128xf32>
    %cst_52 = arith.constant 5.000000e-01 : f32
    %231 = vector.broadcast %cst_52 : f32 to vector<8x128xf32>
    %232 = arith.mulf %231, %230 : vector<8x128xf32>
    %cst_53 = arith.constant 5.000000e-01 : f32
    %233 = vector.broadcast %cst_53 : f32 to vector<8x128xf32>
    %234 = arith.addf %232, %233 : vector<8x128xf32>
    %235 = vector.broadcast %4 : f32 to vector<8x128xf32>
    %236 = arith.mulf %235, %222 : vector<8x128xf32>
    %237 = vector.broadcast %8 : f32 to vector<8x128xf32>
    %238 = arith.mulf %237, %220 : vector<8x128xf32>
    %239 = arith.addf %236, %238 : vector<8x128xf32>
    %240 = vector.broadcast %12 : f32 to vector<8x128xf32>
    %241 = arith.addf %239, %240 : vector<8x128xf32>
    %242 = math.tanh %241 : vector<8x128xf32>
    %cst_54 = arith.constant 5.000000e-01 : f32
    %243 = vector.broadcast %cst_54 : f32 to vector<8x128xf32>
    %244 = arith.mulf %243, %242 : vector<8x128xf32>
    %cst_55 = arith.constant 5.000000e-01 : f32
    %245 = vector.broadcast %cst_55 : f32 to vector<8x128xf32>
    %246 = arith.addf %244, %245 : vector<8x128xf32>
    %247 = vector.broadcast %5 : f32 to vector<8x128xf32>
    %248 = arith.mulf %247, %222 : vector<8x128xf32>
    %249 = vector.broadcast %9 : f32 to vector<8x128xf32>
    %250 = arith.mulf %249, %220 : vector<8x128xf32>
    %251 = arith.addf %248, %250 : vector<8x128xf32>
    %252 = vector.broadcast %13 : f32 to vector<8x128xf32>
    %253 = arith.addf %251, %252 : vector<8x128xf32>
    %254 = math.tanh %253 : vector<8x128xf32>
    %255 = vector.broadcast %6 : f32 to vector<8x128xf32>
    %256 = arith.mulf %255, %222 : vector<8x128xf32>
    %257 = vector.broadcast %10 : f32 to vector<8x128xf32>
    %258 = arith.mulf %257, %220 : vector<8x128xf32>
    %259 = arith.addf %256, %258 : vector<8x128xf32>
    %260 = vector.broadcast %14 : f32 to vector<8x128xf32>
    %261 = arith.addf %259, %260 : vector<8x128xf32>
    %262 = math.tanh %261 : vector<8x128xf32>
    %cst_56 = arith.constant 5.000000e-01 : f32
    %263 = vector.broadcast %cst_56 : f32 to vector<8x128xf32>
    %264 = arith.mulf %263, %262 : vector<8x128xf32>
    %cst_57 = arith.constant 5.000000e-01 : f32
    %265 = vector.broadcast %cst_57 : f32 to vector<8x128xf32>
    %266 = arith.addf %264, %265 : vector<8x128xf32>
    %267 = arith.mulf %246, %218 : vector<8x128xf32>
    %268 = arith.mulf %234, %254 : vector<8x128xf32>
    %269 = arith.addf %267, %268 : vector<8x128xf32>
    %270 = math.tanh %269 : vector<8x128xf32>
    %271 = arith.mulf %266, %270 : vector<8x128xf32>
    %c5_58 = arith.constant 5 : index
    %c0_59 = arith.constant 0 : index
    %c0_60 = arith.constant 0 : index
    %c0_61 = arith.constant 0 : index
    %272 = vector.load %arg4[%c5_58, %c0_59, %c0_60, %c0_61] : memref<8x1x8x128xf32, #tpu.memory_space<vmem>>, vector<1x1x8x128xf32>
    %273 = vector.shape_cast %272 : vector<1x1x8x128xf32> to vector<8x128xf32>
    %274 = vector.broadcast %3 : f32 to vector<8x128xf32>
    %275 = arith.mulf %274, %273 : vector<8x128xf32>
    %276 = vector.broadcast %7 : f32 to vector<8x128xf32>
    %277 = arith.mulf %276, %271 : vector<8x128xf32>
    %278 = arith.addf %275, %277 : vector<8x128xf32>
    %279 = vector.broadcast %11 : f32 to vector<8x128xf32>
    %280 = arith.addf %278, %279 : vector<8x128xf32>
    %281 = math.tanh %280 : vector<8x128xf32>
    %cst_62 = arith.constant 5.000000e-01 : f32
    %282 = vector.broadcast %cst_62 : f32 to vector<8x128xf32>
    %283 = arith.mulf %282, %281 : vector<8x128xf32>
    %cst_63 = arith.constant 5.000000e-01 : f32
    %284 = vector.broadcast %cst_63 : f32 to vector<8x128xf32>
    %285 = arith.addf %283, %284 : vector<8x128xf32>
    %286 = vector.broadcast %4 : f32 to vector<8x128xf32>
    %287 = arith.mulf %286, %273 : vector<8x128xf32>
    %288 = vector.broadcast %8 : f32 to vector<8x128xf32>
    %289 = arith.mulf %288, %271 : vector<8x128xf32>
    %290 = arith.addf %287, %289 : vector<8x128xf32>
    %291 = vector.broadcast %12 : f32 to vector<8x128xf32>
    %292 = arith.addf %290, %291 : vector<8x128xf32>
    %293 = math.tanh %292 : vector<8x128xf32>
    %cst_64 = arith.constant 5.000000e-01 : f32
    %294 = vector.broadcast %cst_64 : f32 to vector<8x128xf32>
    %295 = arith.mulf %294, %293 : vector<8x128xf32>
    %cst_65 = arith.constant 5.000000e-01 : f32
    %296 = vector.broadcast %cst_65 : f32 to vector<8x128xf32>
    %297 = arith.addf %295, %296 : vector<8x128xf32>
    %298 = vector.broadcast %5 : f32 to vector<8x128xf32>
    %299 = arith.mulf %298, %273 : vector<8x128xf32>
    %300 = vector.broadcast %9 : f32 to vector<8x128xf32>
    %301 = arith.mulf %300, %271 : vector<8x128xf32>
    %302 = arith.addf %299, %301 : vector<8x128xf32>
    %303 = vector.broadcast %13 : f32 to vector<8x128xf32>
    %304 = arith.addf %302, %303 : vector<8x128xf32>
    %305 = math.tanh %304 : vector<8x128xf32>
    %306 = vector.broadcast %6 : f32 to vector<8x128xf32>
    %307 = arith.mulf %306, %273 : vector<8x128xf32>
    %308 = vector.broadcast %10 : f32 to vector<8x128xf32>
    %309 = arith.mulf %308, %271 : vector<8x128xf32>
    %310 = arith.addf %307, %309 : vector<8x128xf32>
    %311 = vector.broadcast %14 : f32 to vector<8x128xf32>
    %312 = arith.addf %310, %311 : vector<8x128xf32>
    %313 = math.tanh %312 : vector<8x128xf32>
    %cst_66 = arith.constant 5.000000e-01 : f32
    %314 = vector.broadcast %cst_66 : f32 to vector<8x128xf32>
    %315 = arith.mulf %314, %313 : vector<8x128xf32>
    %cst_67 = arith.constant 5.000000e-01 : f32
    %316 = vector.broadcast %cst_67 : f32 to vector<8x128xf32>
    %317 = arith.addf %315, %316 : vector<8x128xf32>
    %318 = arith.mulf %297, %269 : vector<8x128xf32>
    %319 = arith.mulf %285, %305 : vector<8x128xf32>
    %320 = arith.addf %318, %319 : vector<8x128xf32>
    %321 = math.tanh %320 : vector<8x128xf32>
    %322 = arith.mulf %317, %321 : vector<8x128xf32>
    %c6_68 = arith.constant 6 : index
    %c0_69 = arith.constant 0 : index
    %c0_70 = arith.constant 0 : index
    %c0_71 = arith.constant 0 : index
    %323 = vector.load %arg4[%c6_68, %c0_69, %c0_70, %c0_71] : memref<8x1x8x128xf32, #tpu.memory_space<vmem>>, vector<1x1x8x128xf32>
    %324 = vector.shape_cast %323 : vector<1x1x8x128xf32> to vector<8x128xf32>
    %325 = vector.broadcast %3 : f32 to vector<8x128xf32>
    %326 = arith.mulf %325, %324 : vector<8x128xf32>
    %327 = vector.broadcast %7 : f32 to vector<8x128xf32>
    %328 = arith.mulf %327, %322 : vector<8x128xf32>
    %329 = arith.addf %326, %328 : vector<8x128xf32>
    %330 = vector.broadcast %11 : f32 to vector<8x128xf32>
    %331 = arith.addf %329, %330 : vector<8x128xf32>
    %332 = math.tanh %331 : vector<8x128xf32>
    %cst_72 = arith.constant 5.000000e-01 : f32
    %333 = vector.broadcast %cst_72 : f32 to vector<8x128xf32>
    %334 = arith.mulf %333, %332 : vector<8x128xf32>
    %cst_73 = arith.constant 5.000000e-01 : f32
    %335 = vector.broadcast %cst_73 : f32 to vector<8x128xf32>
    %336 = arith.addf %334, %335 : vector<8x128xf32>
    %337 = vector.broadcast %4 : f32 to vector<8x128xf32>
    %338 = arith.mulf %337, %324 : vector<8x128xf32>
    %339 = vector.broadcast %8 : f32 to vector<8x128xf32>
    %340 = arith.mulf %339, %322 : vector<8x128xf32>
    %341 = arith.addf %338, %340 : vector<8x128xf32>
    %342 = vector.broadcast %12 : f32 to vector<8x128xf32>
    %343 = arith.addf %341, %342 : vector<8x128xf32>
    %344 = math.tanh %343 : vector<8x128xf32>
    %cst_74 = arith.constant 5.000000e-01 : f32
    %345 = vector.broadcast %cst_74 : f32 to vector<8x128xf32>
    %346 = arith.mulf %345, %344 : vector<8x128xf32>
    %cst_75 = arith.constant 5.000000e-01 : f32
    %347 = vector.broadcast %cst_75 : f32 to vector<8x128xf32>
    %348 = arith.addf %346, %347 : vector<8x128xf32>
    %349 = vector.broadcast %5 : f32 to vector<8x128xf32>
    %350 = arith.mulf %349, %324 : vector<8x128xf32>
    %351 = vector.broadcast %9 : f32 to vector<8x128xf32>
    %352 = arith.mulf %351, %322 : vector<8x128xf32>
    %353 = arith.addf %350, %352 : vector<8x128xf32>
    %354 = vector.broadcast %13 : f32 to vector<8x128xf32>
    %355 = arith.addf %353, %354 : vector<8x128xf32>
    %356 = math.tanh %355 : vector<8x128xf32>
    %357 = vector.broadcast %6 : f32 to vector<8x128xf32>
    %358 = arith.mulf %357, %324 : vector<8x128xf32>
    %359 = vector.broadcast %10 : f32 to vector<8x128xf32>
    %360 = arith.mulf %359, %322 : vector<8x128xf32>
    %361 = arith.addf %358, %360 : vector<8x128xf32>
    %362 = vector.broadcast %14 : f32 to vector<8x128xf32>
    %363 = arith.addf %361, %362 : vector<8x128xf32>
    %364 = math.tanh %363 : vector<8x128xf32>
    %cst_76 = arith.constant 5.000000e-01 : f32
    %365 = vector.broadcast %cst_76 : f32 to vector<8x128xf32>
    %366 = arith.mulf %365, %364 : vector<8x128xf32>
    %cst_77 = arith.constant 5.000000e-01 : f32
    %367 = vector.broadcast %cst_77 : f32 to vector<8x128xf32>
    %368 = arith.addf %366, %367 : vector<8x128xf32>
    %369 = arith.mulf %348, %320 : vector<8x128xf32>
    %370 = arith.mulf %336, %356 : vector<8x128xf32>
    %371 = arith.addf %369, %370 : vector<8x128xf32>
    %372 = math.tanh %371 : vector<8x128xf32>
    %373 = arith.mulf %368, %372 : vector<8x128xf32>
    %c7_78 = arith.constant 7 : index
    %c0_79 = arith.constant 0 : index
    %c0_80 = arith.constant 0 : index
    %c0_81 = arith.constant 0 : index
    %374 = vector.load %arg4[%c7_78, %c0_79, %c0_80, %c0_81] : memref<8x1x8x128xf32, #tpu.memory_space<vmem>>, vector<1x1x8x128xf32>
    %375 = vector.shape_cast %374 : vector<1x1x8x128xf32> to vector<8x128xf32>
    %376 = vector.broadcast %3 : f32 to vector<8x128xf32>
    %377 = arith.mulf %376, %375 : vector<8x128xf32>
    %378 = vector.broadcast %7 : f32 to vector<8x128xf32>
    %379 = arith.mulf %378, %373 : vector<8x128xf32>
    %380 = arith.addf %377, %379 : vector<8x128xf32>
    %381 = vector.broadcast %11 : f32 to vector<8x128xf32>
    %382 = arith.addf %380, %381 : vector<8x128xf32>
    %383 = math.tanh %382 : vector<8x128xf32>
    %cst_82 = arith.constant 5.000000e-01 : f32
    %384 = vector.broadcast %cst_82 : f32 to vector<8x128xf32>
    %385 = arith.mulf %384, %383 : vector<8x128xf32>
    %cst_83 = arith.constant 5.000000e-01 : f32
    %386 = vector.broadcast %cst_83 : f32 to vector<8x128xf32>
    %387 = arith.addf %385, %386 : vector<8x128xf32>
    %388 = vector.broadcast %4 : f32 to vector<8x128xf32>
    %389 = arith.mulf %388, %375 : vector<8x128xf32>
    %390 = vector.broadcast %8 : f32 to vector<8x128xf32>
    %391 = arith.mulf %390, %373 : vector<8x128xf32>
    %392 = arith.addf %389, %391 : vector<8x128xf32>
    %393 = vector.broadcast %12 : f32 to vector<8x128xf32>
    %394 = arith.addf %392, %393 : vector<8x128xf32>
    %395 = math.tanh %394 : vector<8x128xf32>
    %cst_84 = arith.constant 5.000000e-01 : f32
    %396 = vector.broadcast %cst_84 : f32 to vector<8x128xf32>
    %397 = arith.mulf %396, %395 : vector<8x128xf32>
    %cst_85 = arith.constant 5.000000e-01 : f32
    %398 = vector.broadcast %cst_85 : f32 to vector<8x128xf32>
    %399 = arith.addf %397, %398 : vector<8x128xf32>
    %400 = vector.broadcast %5 : f32 to vector<8x128xf32>
    %401 = arith.mulf %400, %375 : vector<8x128xf32>
    %402 = vector.broadcast %9 : f32 to vector<8x128xf32>
    %403 = arith.mulf %402, %373 : vector<8x128xf32>
    %404 = arith.addf %401, %403 : vector<8x128xf32>
    %405 = vector.broadcast %13 : f32 to vector<8x128xf32>
    %406 = arith.addf %404, %405 : vector<8x128xf32>
    %407 = math.tanh %406 : vector<8x128xf32>
    %408 = vector.broadcast %6 : f32 to vector<8x128xf32>
    %409 = arith.mulf %408, %375 : vector<8x128xf32>
    %410 = vector.broadcast %10 : f32 to vector<8x128xf32>
    %411 = arith.mulf %410, %373 : vector<8x128xf32>
    %412 = arith.addf %409, %411 : vector<8x128xf32>
    %413 = vector.broadcast %14 : f32 to vector<8x128xf32>
    %414 = arith.addf %412, %413 : vector<8x128xf32>
    %415 = math.tanh %414 : vector<8x128xf32>
    %cst_86 = arith.constant 5.000000e-01 : f32
    %416 = vector.broadcast %cst_86 : f32 to vector<8x128xf32>
    %417 = arith.mulf %416, %415 : vector<8x128xf32>
    %cst_87 = arith.constant 5.000000e-01 : f32
    %418 = vector.broadcast %cst_87 : f32 to vector<8x128xf32>
    %419 = arith.addf %417, %418 : vector<8x128xf32>
    %420 = arith.mulf %399, %371 : vector<8x128xf32>
    %421 = arith.mulf %387, %407 : vector<8x128xf32>
    %422 = arith.addf %420, %421 : vector<8x128xf32>
    %423 = math.tanh %422 : vector<8x128xf32>
    %424 = arith.mulf %419, %423 : vector<8x128xf32>
    %c0_88 = arith.constant 0 : index
    %c0_89 = arith.constant 0 : index
    %425 = vector.load %arg6[%c0_88, %c0_89] : memref<8x128xf32, #tpu.memory_space<vmem>>, vector<8x128xf32>
    tpu.vector_store %arg6[%c0_88, %c0_89], %424 {strides = array<i32>} : memref<8x128xf32, #tpu.memory_space<vmem>>, vector<8x128xf32>,
    %c0_90 = arith.constant 0 : index
    %c0_91 = arith.constant 0 : index
    %426 = vector.load %arg7[%c0_90, %c0_91] : memref<8x128xf32, #tpu.memory_space<vmem>>, vector<8x128xf32>
    tpu.vector_store %arg7[%c0_90, %c0_91], %422 {strides = array<i32>} : memref<8x128xf32, #tpu.memory_space<vmem>>, vector<8x128xf32>,
    %c0_i32_92 = arith.constant 0 : i32
    %427 = arith.cmpi eq, %arg1, %c0_i32_92 : i32
    %428 = arith.extui %427 : i1 to i32
    %c0_i32_93 = arith.constant 0 : i32
    %429 = arith.cmpi ne, %428, %c0_i32_93 : i32
    scf.if %429 {
      %c0_94 = arith.constant 0 : index
      %c0_95 = arith.constant 0 : index
      %c0_96 = arith.constant 0 : index
      %430 = vector.load %arg5[%c0_94, %c0_95, %c0_96] : memref<1x8x128xf32, #tpu.memory_space<vmem>>, vector<1x8x128xf32>
      %431 = vector.shape_cast %430 : vector<1x8x128xf32> to vector<8x128xf32>
      %432 = vector.shape_cast %424 : vector<8x128xf32> to vector<1x8x128xf32>
      tpu.vector_store %arg5[%c0_94, %c0_95, %c0_96], %432 {strides = array<i32>} : memref<1x8x128xf32, #tpu.memory_space<vmem>>, vector<1x8x128xf32>,
    } else {
    }
    return
  }
  func.func @transform_0(%arg0: i32, %arg1: i32) -> i32 {
    %c0_i32 = arith.constant 0 : i32
    %c0_i32_0 = arith.constant 0 : i32
    return %c0_i32 : i32
  }
  func.func @transform_1(%arg0: i32, %arg1: i32) -> i32 {
    %c0_i32 = arith.constant 0 : i32
    %c0_i32_0 = arith.constant 0 : i32
    return %c0_i32 : i32
  }
  func.func @transform_2(%arg0: i32, %arg1: i32) -> (i32, i32, i32, i32) {
    %c0_i32 = arith.constant 0 : i32
    %c0_i32_0 = arith.constant 0 : i32
    %c0_i32_1 = arith.constant 0 : i32
    return %arg1, %arg0, %c0_i32, %c0_i32_0 : i32, i32, i32, i32
  }
  func.func @transform_3(%arg0: i32, %arg1: i32) -> (i32, i32, i32) {
    %c0_i32 = arith.constant 0 : i32
    %c0_i32_0 = arith.constant 0 : i32
    %c0_i32_1 = arith.constant 0 : i32
    return %arg0, %c0_i32, %c0_i32_0 : i32, i32, i32
  }
}

</mosaic_0001>

<llo_original>
// kernel: tpu_custom_call.1
$region0: #{tpu_custom_call.1}
  #allocation0 [shape = 'u32[]', space=smem, size = 0x4, offset = 0x4, fixed_abs, tag = 'smem constant byte address 0x4 - core index']
  #allocation1 [shape = 'u32[144,128]{1,0:T(1,128)}', space=vmem, size = 0x12000, scoped, tag = 'internal scratch']
  #allocation2 [shape = 'f32[8,128]{1,0:T(8,128)}', space=vmem, size = 0x1000, scoped, tag = 'scratch operand']
  #allocation3 [shape = 'f32[8,128]{1,0:T(8,128)}', space=vmem, size = 0x1000, scoped, tag = 'scratch operand']
  %s0 = inlined_call_operand.hbm [shape: f32[8], index: 0, kind: input, shape index: {}]
  %s1 = inlined_call_operand.vmem [shape: f32[4], index: 1, kind: input, shape index: {}]
  %s2 = inlined_call_operand.hbm [shape: f32[8,1,8,128], index: 2, kind: input, shape index: {}]
  %s3 = inlined_call_operand.hbm [shape: f32[1,8,128], index: 3, kind: output, shape index: {}]
  %s4 = sld [smem:[#allocation0]]
  $region42: #{tpu_custom_call.1} parent=0
    _
  %s6 = ssub.s32 1, %s4
  %s7 = scalar_select 0, %s6, %s4
  $region1: #{tpu_custom_call.1} parent=0
    #allocation4 [shape = 'u8[512]{0}', space=smem, size = 0x200, scoped, tag = 'input window, operand 0, single buffered']
    #allocation5 [shape = 's32[1]{0}', space=sflag, size = 0x4, scoped, tag = 'scoped memory for tpu_custom_call.1']
    #allocation6 [shape = 's32[1]{0}', space=sflag, size = 0x4, scoped, tag = 'scoped memory for tpu_custom_call.1']
    #allocation7 [shape = 's32[1]{0}', space=sflag, size = 0x4, scoped, tag = 'scoped memory for tpu_custom_call.1']
    #allocation8 [shape = 's32[1]{0}', space=sflag, size = 0x4, scoped, tag = 'scoped memory for tpu_custom_call.1']
    #allocation9 [shape = 'u8[512]{0}', space=smem, size = 0x200, scoped, tag = 'input window, operand 1, single buffered']
    #allocation10 [shape = 'u8[32768]{0}', space=vmem, size = 0x8000, scoped, tag = 'input window, operand 2, single buffered']
    #allocation11 [shape = 'u8[4096]{0}', space=vmem, size = 0x1000, scoped, tag = 'output window, operand 0, single buffered']
    %8 = vsyncpa [#allocation7], 0
    %9 = vsyncpa [#allocation8], 0
    %10 = vsyncpa [#allocation5], 0
    %11 = vsyncpa [#allocation6], 0
    // Predicated region
    $region2: #{tpu_custom_call.1} parent=1 // pred_check
      _
    $region3: #{tpu_custom_call.1} parent=1 // pred_check_branch
      %13 = sbr.rel (0) target = $region5
    $region4: #{tpu_custom_call.1} parent=1 // pred_region
      %s15 = ssub.s32 16, 16
      %16 = vsyncadd [#allocation7], %s15
      %19 = dma.hbm_to_smem %s0, 16, [#allocation4], [#allocation7]
    $region5: #{tpu_custom_call.1} parent=1 // pred_fallthru
      _
    // Predicated region
    $region6: #{tpu_custom_call.1} parent=1 // pred_check
      _
    $region7: #{tpu_custom_call.1} parent=1 // pred_check_branch
      %21 = sbr.rel (0) target = $region9
    $region8: #{tpu_custom_call.1} parent=1 // pred_region
      %s23 = ssub.s32 16, 16
      %24 = vsyncadd [#allocation8], %s23
      %s26 = sshll.u32 %s1, 4
      %s27 = int_to_ptr.vmem [resolvable:$true] %s26
      %29 = dma.vmem_to_smem %s27, 16, [#allocation9], [#allocation8]
    $region9: #{tpu_custom_call.1} parent=1 // pred_fallthru
      _
    // Predicated region
    $region10: #{tpu_custom_call.1} parent=1 // pred_check
      _
    $region11: #{tpu_custom_call.1} parent=1 // pred_check_branch
      %31 = sbr.rel (0) target = $region13
    $region12: #{tpu_custom_call.1} parent=1 // pred_region
      %s33 = ssub.s32 1024, 1024
      %34 = vsyncadd [#allocation5], %s33
      %s35 = sshll.u32 [#allocation10], 4
      %s36 = int_to_ptr.vmem [resolvable:$true] %s35
      %41 = dma.hbm_to_vmem [thread:$0]  %s2, 1024, %s36, [#allocation5], 128, 128, 8
    $region13: #{tpu_custom_call.1} parent=1 // pred_fallthru
      _
    // Predicated region
    $region14: #{tpu_custom_call.1} parent=1 // pred_check
      _
    $region15: #{tpu_custom_call.1} parent=1 // pred_check_branch
      %43 = sbr.rel (0) target = $region17
    $region16: #{tpu_custom_call.1} parent=1 // pred_region
      %44 = dma.done [#allocation7], 16
    $region17: #{tpu_custom_call.1} parent=1 // pred_fallthru
      _
    // Predicated region
    $region18: #{tpu_custom_call.1} parent=1 // pred_check
      _
    $region19: #{tpu_custom_call.1} parent=1 // pred_check_branch
      %46 = sbr.rel (0) target = $region21
    $region20: #{tpu_custom_call.1} parent=1 // pred_region
      %47 = dma.done [#allocation8], 16
    $region21: #{tpu_custom_call.1} parent=1 // pred_fallthru
      _
    // Predicated region
    $region22: #{tpu_custom_call.1} parent=1 // pred_check
      _
    $region23: #{tpu_custom_call.1} parent=1 // pred_check_branch
      %49 = sbr.rel (0) target = $region25
    $region24: #{tpu_custom_call.1} parent=1 // pred_region
      %50 = dma.done [#allocation5], 1024
    $region25: #{tpu_custom_call.1} parent=1 // pred_fallthru
      _
    %51 = sfence
    %p52 = scmp.eq.s32.totalorder 0, 0
    // Predicated region
    $region26: #{tpu_custom_call.1} parent=1 // pred_check
      %p53 = pneg %p52
    $region27: #{tpu_custom_call.1} parent=1 // pred_check_branch
      %55 = sbr.rel (%p53) target = $region29
    $region28: #{tpu_custom_call.1} parent=1 // pred_region
      %56 = vst [vmem:[#allocation2] sm:$0xff] 0.0
      %57 = vst [vmem:[#allocation3] sm:$0xff] 0.0
    $region29: #{tpu_custom_call.1} parent=1 // pred_fallthru
      _
    %s58 = sld [smem:[#allocation4]]
    %s59 = sld [smem:[#allocation4 + $0x1]]
    %s60 = sld [smem:[#allocation4 + $0x2]]
    %s61 = sld [smem:[#allocation4 + $0x3]]
    %s62 = sld [smem:[#allocation4 + $0x4]]
    %s63 = sld [smem:[#allocation4 + $0x5]]
    %s64 = sld [smem:[#allocation4 + $0x6]]
    %s65 = sld [smem:[#allocation4 + $0x7]]
    %s66 = sld [smem:[#allocation9]]
    %s67 = sld [smem:[#allocation9 + $0x1]]
    %s68 = sld [smem:[#allocation9 + $0x2]]
    %s69 = sld [smem:[#allocation9 + $0x3]]
    %v70 = vld [vmem:[#allocation2] sm:$0xff]
    %v71 = vld [vmem:[#allocation3] sm:$0xff]
    %v72 = vld [vmem:[#allocation10] sm:$0xff]
    %v73 = vstv %s58
    %v74 = vmul.f32 %v73, %v72
    %v75 = vstv %s62
    %v76 = vmul.f32 %v75, %v70
    %v77 = vadd.f32 %v74, %v76
    %v78 = vstv %s66
    %v79 = vadd.f32 %v77, %v78
    %v80 = vtanh.pop %v79
    %v81 = vmul.f32 %v80, 0.5
    %v82 = vadd.f32 %v81, 0.5
    %v83 = vstv %s59
    %v84 = vmul.f32 %v83, %v72
    %v85 = vstv %s63
    %v86 = vmul.f32 %v85, %v70
    %v87 = vadd.f32 %v84, %v86
    %v88 = vstv %s67
    %v89 = vadd.f32 %v87, %v88
    %v90 = vtanh.pop %v89
    %v91 = vmul.f32 %v90, 0.5
    %v92 = vadd.f32 %v91, 0.5
    %v93 = vstv %s60
    %v94 = vmul.f32 %v93, %v72
    %v95 = vstv %s64
    %v96 = vmul.f32 %v95, %v70
    %v97 = vadd.f32 %v94, %v96
    %v98 = vstv %s68
    %v99 = vadd.f32 %v97, %v98
    %v100 = vtanh.pop %v99
    %v101 = vstv %s61
    %v102 = vmul.f32 %v101, %v72
    %v103 = vstv %s65
    %v104 = vmul.f32 %v103, %v70
    %v105 = vadd.f32 %v102, %v104
    %v106 = vstv %s69
    %v107 = vadd.f32 %v105, %v106
    %v108 = vtanh.pop %v107
    %v109 = vmul.f32 %v108, 0.5
    %v110 = vadd.f32 %v109, 0.5
    %v111 = vmul.f32 %v92, %v71
    %v112 = vmul.f32 %v82, %v100
    %v113 = vadd.f32 %v111, %v112
    %v114 = vtanh.pop %v113
    %v115 = vmul.f32 %v110, %v114
    %s116 = scalar_lea.vmem [#allocation10], 8
    %v117 = vld [vmem:[%s116] sm:$0xff]
    %v118 = vmul.f32 %v73, %v117
    %v119 = vmul.f32 %v75, %v115
    %v120 = vadd.f32 %v118, %v119
    %v121 = vadd.f32 %v120, %v78
    %v122 = vtanh.pop %v121
    %v123 = vmul.f32 %v122, 0.5
    %v124 = vadd.f32 %v123, 0.5
    %v125 = vmul.f32 %v83, %v117
    %v126 = vmul.f32 %v85, %v115
    %v127 = vadd.f32 %v125, %v126
    %v128 = vadd.f32 %v127, %v88
    %v129 = vtanh.pop %v128
    %v130 = vmul.f32 %v129, 0.5
    %v131 = vadd.f32 %v130, 0.5
    %v132 = vmul.f32 %v93, %v117
    %v133 = vmul.f32 %v95, %v115
    %v134 = vadd.f32 %v132, %v133
    %v135 = vadd.f32 %v134, %v98
    %v136 = vtanh.pop %v135
    %v137 = vmul.f32 %v101, %v117
    %v138 = vmul.f32 %v103, %v115
    %v139 = vadd.f32 %v137, %v138
    %v140 = vadd.f32 %v139, %v106
    %v141 = vtanh.pop %v140
    %v142 = vmul.f32 %v141, 0.5
    %v143 = vadd.f32 %v142, 0.5
    %v144 = vmul.f32 %v131, %v113
    %v145 = vmul.f32 %v124, %v136
    %v146 = vadd.f32 %v144, %v145
    %v147 = vtanh.pop %v146
    %v148 = vmul.f32 %v143, %v147
    %s149 = scalar_lea.vmem [#allocation10], 16
    %v150 = vld [vmem:[%s149] sm:$0xff]
    %v151 = vmul.f32 %v73, %v150
    %v152 = vmul.f32 %v75, %v148
    %v153 = vadd.f32 %v151, %v152
    %v154 = vadd.f32 %v153, %v78
    %v155 = vtanh.pop %v154
    %v156 = vmul.f32 %v155, 0.5
    %v157 = vadd.f32 %v156, 0.5
    %v158 = vmul.f32 %v83, %v150
    %v159 = vmul.f32 %v85, %v148
    %v160 = vadd.f32 %v158, %v159
    %v161 = vadd.f32 %v160, %v88
    %v162 = vtanh.pop %v161
    %v163 = vmul.f32 %v162, 0.5
    %v164 = vadd.f32 %v163, 0.5
    %v165 = vmul.f32 %v93, %v150
    %v166 = vmul.f32 %v95, %v148
    %v167 = vadd.f32 %v165, %v166
    %v168 = vadd.f32 %v167, %v98
    %v169 = vtanh.pop %v168
    %v170 = vmul.f32 %v101, %v150
    %v171 = vmul.f32 %v103, %v148
    %v172 = vadd.f32 %v170, %v171
    %v173 = vadd.f32 %v172, %v106
    %v174 = vtanh.pop %v173
    %v175 = vmul.f32 %v174, 0.5
    %v176 = vadd.f32 %v175, 0.5
    %v177 = vmul.f32 %v164, %v146
    %v178 = vmul.f32 %v157, %v169
    %v179 = vadd.f32 %v177, %v178
    %v180 = vtanh.pop %v179
    %v181 = vmul.f32 %v176, %v180
    %s182 = scalar_lea.vmem [#allocation10], 24
    %v183 = vld [vmem:[%s182] sm:$0xff]
    %v184 = vmul.f32 %v73, %v183
    %v185 = vmul.f32 %v75, %v181
    %v186 = vadd.f32 %v184, %v185
    %v187 = vadd.f32 %v186, %v78
    %v188 = vtanh.pop %v187
    %v189 = vmul.f32 %v188, 0.5
    %v190 = vadd.f32 %v189, 0.5
    %v191 = vmul.f32 %v83, %v183
    %v192 = vmul.f32 %v85, %v181
    %v193 = vadd.f32 %v191, %v192
    %v194 = vadd.f32 %v193, %v88
    %v195 = vtanh.pop %v194
    %v196 = vmul.f32 %v195, 0.5
    %v197 = vadd.f32 %v196, 0.5
    %v198 = vmul.f32 %v93, %v183
    %v199 = vmul.f32 %v95, %v181
    %v200 = vadd.f32 %v198, %v199
    %v201 = vadd.f32 %v200, %v98
    %v202 = vtanh.pop %v201
    %v203 = vmul.f32 %v101, %v183
    %v204 = vmul.f32 %v103, %v181
    %v205 = vadd.f32 %v203, %v204
    %v206 = vadd.f32 %v205, %v106
    %v207 = vtanh.pop %v206
    %v208 = vmul.f32 %v207, 0.5
    %v209 = vadd.f32 %v208, 0.5
    %v210 = vmul.f32 %v197, %v179
    %v211 = vmul.f32 %v190, %v202
    %v212 = vadd.f32 %v210, %v211
    %v213 = vtanh.pop %v212
    %v214 = vmul.f32 %v209, %v213
    %s215 = scalar_lea.vmem [#allocation10], 32
    %v216 = vld [vmem:[%s215] sm:$0xff]
    %v217 = vmul.f32 %v73, %v216
    %v218 = vmul.f32 %v75, %v214
    %v219 = vadd.f32 %v217, %v218
    %v220 = vadd.f32 %v219, %v78
    %v221 = vtanh.pop %v220
    %v222 = vmul.f32 %v221, 0.5
    %v223 = vadd.f32 %v222, 0.5
    %v224 = vmul.f32 %v83, %v216
    %v225 = vmul.f32 %v85, %v214
    %v226 = vadd.f32 %v224, %v225
    %v227 = vadd.f32 %v226, %v88
    %v228 = vtanh.pop %v227
    %v229 = vmul.f32 %v228, 0.5
    %v230 = vadd.f32 %v229, 0.5
    %v231 = vmul.f32 %v93, %v216
    %v232 = vmul.f32 %v95, %v214
    %v233 = vadd.f32 %v231, %v232
    %v234 = vadd.f32 %v233, %v98
    %v235 = vtanh.pop %v234
    %v236 = vmul.f32 %v101, %v216
    %v237 = vmul.f32 %v103, %v214
    %v238 = vadd.f32 %v236, %v237
    %v239 = vadd.f32 %v238, %v106
    %v240 = vtanh.pop %v239
    %v241 = vmul.f32 %v240, 0.5
    %v242 = vadd.f32 %v241, 0.5
    %v243 = vmul.f32 %v230, %v212
    %v244 = vmul.f32 %v223, %v235
    %v245 = vadd.f32 %v243, %v244
    %v246 = vtanh.pop %v245
    %v247 = vmul.f32 %v242, %v246
    %s248 = scalar_lea.vmem [#allocation10], 40
    %v249 = vld [vmem:[%s248] sm:$0xff]
    %v250 = vmul.f32 %v73, %v249
    %v251 = vmul.f32 %v75, %v247
    %v252 = vadd.f32 %v250, %v251
    %v253 = vadd.f32 %v252, %v78
    %v254 = vtanh.pop %v253
    %v255 = vmul.f32 %v254, 0.5
    %v256 = vadd.f32 %v255, 0.5
    %v257 = vmul.f32 %v83, %v249
    %v258 = vmul.f32 %v85, %v247
    %v259 = vadd.f32 %v257, %v258
    %v260 = vadd.f32 %v259, %v88
    %v261 = vtanh.pop %v260
    %v262 = vmul.f32 %v261, 0.5
    %v263 = vadd.f32 %v262, 0.5
    %v264 = vmul.f32 %v93, %v249
    %v265 = vmul.f32 %v95, %v247
    %v266 = vadd.f32 %v264, %v265
    %v267 = vadd.f32 %v266, %v98
    %v268 = vtanh.pop %v267
    %v269 = vmul.f32 %v101, %v249
    %v270 = vmul.f32 %v103, %v247
    %v271 = vadd.f32 %v269, %v270
    %v272 = vadd.f32 %v271, %v106
    %v273 = vtanh.pop %v272
    %v274 = vmul.f32 %v273, 0.5
    %v275 = vadd.f32 %v274, 0.5
    %v276 = vmul.f32 %v263, %v245
    %v277 = vmul.f32 %v256, %v268
    %v278 = vadd.f32 %v276, %v277
    %v279 = vtanh.pop %v278
    %v280 = vmul.f32 %v275, %v279
    %s281 = scalar_lea.vmem [#allocation10], 48
    %v282 = vld [vmem:[%s281] sm:$0xff]
    %v283 = vmul.f32 %v73, %v282
    %v284 = vmul.f32 %v75, %v280
    %v285 = vadd.f32 %v283, %v284
    %v286 = vadd.f32 %v285, %v78
    %v287 = vtanh.pop %v286
    %v288 = vmul.f32 %v287, 0.5
    %v289 = vadd.f32 %v288, 0.5
    %v290 = vmul.f32 %v83, %v282
    %v291 = vmul.f32 %v85, %v280
    %v292 = vadd.f32 %v290, %v291
    %v293 = vadd.f32 %v292, %v88
    %v294 = vtanh.pop %v293
    %v295 = vmul.f32 %v294, 0.5
    %v296 = vadd.f32 %v295, 0.5
    %v297 = vmul.f32 %v93, %v282
    %v298 = vmul.f32 %v95, %v280
    %v299 = vadd.f32 %v297, %v298
    %v300 = vadd.f32 %v299, %v98
    %v301 = vtanh.pop %v300
    %v302 = vmul.f32 %v101, %v282
    %v303 = vmul.f32 %v103, %v280
    %v304 = vadd.f32 %v302, %v303
    %v305 = vadd.f32 %v304, %v106
    %v306 = vtanh.pop %v305
    %v307 = vmul.f32 %v306, 0.5
    %v308 = vadd.f32 %v307, 0.5
    %v309 = vmul.f32 %v296, %v278
    %v310 = vmul.f32 %v289, %v301
    %v311 = vadd.f32 %v309, %v310
    %v312 = vtanh.pop %v311
    %v313 = vmul.f32 %v308, %v312
    %s314 = scalar_lea.vmem [#allocation10], 56
    %v315 = vld [vmem:[%s314] sm:$0xff]
    %v316 = vmul.f32 %v73, %v315
    %v317 = vmul.f32 %v75, %v313
    %v318 = vadd.f32 %v316, %v317
    %v319 = vadd.f32 %v318, %v78
    %v320 = vtanh.pop %v319
    %v321 = vmul.f32 %v320, 0.5
    %v322 = vadd.f32 %v321, 0.5
    %v323 = vmul.f32 %v83, %v315
    %v324 = vmul.f32 %v85, %v313
    %v325 = vadd.f32 %v323, %v324
    %v326 = vadd.f32 %v325, %v88
    %v327 = vtanh.pop %v326
    %v328 = vmul.f32 %v327, 0.5
    %v329 = vadd.f32 %v328, 0.5
    %v330 = vmul.f32 %v93, %v315
    %v331 = vmul.f32 %v95, %v313
    %v332 = vadd.f32 %v330, %v331
    %v333 = vadd.f32 %v332, %v98
    %v334 = vtanh.pop %v333
    %v335 = vmul.f32 %v101, %v315
    %v336 = vmul.f32 %v103, %v313
    %v337 = vadd.f32 %v335, %v336
    %v338 = vadd.f32 %v337, %v106
    %v339 = vtanh.pop %v338
    %v340 = vmul.f32 %v339, 0.5
    %v341 = vadd.f32 %v340, 0.5
    %v342 = vmul.f32 %v329, %v311
    %v343 = vmul.f32 %v322, %v334
    %v344 = vadd.f32 %v342, %v343
    %v345 = vtanh.pop %v344
    %v346 = vmul.f32 %v341, %v345
    %347 = vst [vmem:[#allocation2] sm:$0xff] %v346
    %348 = vst [vmem:[#allocation3] sm:$0xff] %v344
    // Predicated region
    $region30: #{tpu_custom_call.1} parent=1 // pred_check
      %p349 = pneg %p52
    $region31: #{tpu_custom_call.1} parent=1 // pred_check_branch
      %351 = sbr.rel (%p349) target = $region33
    $region32: #{tpu_custom_call.1} parent=1 // pred_region
      %352 = vst [vmem:[#allocation11] sm:$0xff] %v346
    $region33: #{tpu_custom_call.1} parent=1 // pred_fallthru
      _
    // Predicated region
    $region34: #{tpu_custom_call.1} parent=1 // pred_check
      _
    $region35: #{tpu_custom_call.1} parent=1 // pred_check_branch
      %354 = sbr.rel (0) target = $region37
    $region36: #{tpu_custom_call.1} parent=1 // pred_region
      %s356 = ssub.s32 128, 128
      %357 = vsyncadd [#allocation6], %s356
      %s359 = sshll.u32 [#allocation11], 4
      %s360 = int_to_ptr.vmem [resolvable:$true] %s359
      %362 = dma.vmem_to_hbm [thread:$0]  %s360, 128, %s3, [#allocation6]
    $region37: #{tpu_custom_call.1} parent=1 // pred_fallthru
      _
    // Predicated region
    $region38: #{tpu_custom_call.1} parent=1 // pred_check
      _
    $region39: #{tpu_custom_call.1} parent=1 // pred_check_branch
      %364 = sbr.rel (0) target = $region41
    $region40: #{tpu_custom_call.1} parent=1 // pred_region
      %365 = dma.done [#allocation6], 128
    $region41: #{tpu_custom_call.1} parent=1 // pred_fallthru
      _
    %366 = vsyncpa [#allocation5], 1
    %367 = vsyncpa [#allocation6], 1
    %368 = vsyncpa [#allocation7], 1
    %369 = vsyncpa [#allocation8], 1

</llo_original>
